<compile_context>
chip_gen: v7x
topology: tpu7x:2x2x1
jax: 0.10.0
libtpu: 0.0.40
codegen_flags: <defaults>
</compile_context>

<pallas_src>
import functools

import jax
import jax.numpy as jnp
from jax.experimental import pallas as pl
from jax.experimental.pallas import tpu as pltpu


_VMEM_LIMIT = 32 * 1024 * 1024   # conservative scoped-VMEM budget (v5e/v6e/v7x safe)


def _pick_tile(total, candidates):
    """Largest candidate tile that evenly divides `total`, else the full extent."""
    for c in candidates:
        if total % c == 0:
            return c
    return total


# ----------------------------- Pallas GEMM kernel --------------------------- #

def _gemm_kernel(*refs, add_bias, post_act):
    """acc(Cout,tm) += W(Cout,tk) @ P(tk,tm); epilogue (+bias, tanh) at last K step."""
    if add_bias:
        w_ref, p_ref, b_ref, o_ref, acc_ref = refs
    else:
        w_ref, p_ref, o_ref, acc_ref = refs
        b_ref = None

    k = pl.program_id(1)

    @pl.when(k == 0)
    def _():
        acc_ref[...] = jnp.zeros_like(acc_ref)

    acc_ref[...] += jnp.dot(w_ref[...], p_ref[...],
                            preferred_element_type=jnp.float32)

    @pl.when(k == pl.num_programs(1) - 1)
    def _():
        acc = acc_ref[...]
        if add_bias:
            acc = acc + b_ref[...]
        if post_act == "tanh":
            acc = jnp.tanh(acc)
        o_ref[...] = acc.astype(o_ref.dtype)


def _gemm(wmat, patches, bias=None, post_act="none"):
    """wmat: (Cout, K), patches: (K, M)  ->  (Cout, M) float32 (lane-dense output)."""
    Cout, K = wmat.shape
    K2, M = patches.shape
    assert K == K2
    tm = _pick_tile(M, (1024, 512, 256, 128))
    tk = _pick_tile(K, (512, 256, 128))
    grid = (M // tm, K // tk)
    add_bias = bias is not None

    in_specs = [pl.BlockSpec((Cout, tk), lambda i, j: (0, j)),
                pl.BlockSpec((tk, tm), lambda i, j: (j, i))]
    args = [wmat.astype(jnp.bfloat16),        # bf16 MXU operands, f32 accumulation
            patches.astype(jnp.bfloat16)]
    if add_bias:                              # only DMA a bias buffer when it exists
        in_specs.append(pl.BlockSpec((Cout, 1), lambda i, j: (0, 0)))
        args.append(bias.reshape(Cout, 1).astype(jnp.float32))

    kernel = functools.partial(_gemm_kernel, add_bias=add_bias, post_act=post_act)
    return pl.pallas_call(
        kernel,
        out_shape=jax.ShapeDtypeStruct((Cout, M), jnp.float32),
        grid=grid,
        in_specs=in_specs,
        out_specs=pl.BlockSpec((Cout, tm), lambda i, j: (0, i)),
        scratch_shapes=[pltpu.VMEM((Cout, tm), jnp.float32)],
        compiler_params=pltpu.CompilerParams(
            dimension_semantics=("parallel", "arbitrary"),
            vmem_limit_bytes=_VMEM_LIMIT),
    )(*args)


# --------------------------- Pallas BatchNorm kernels ------------------------ #

def _bn_stats_kernel(x_ref, sum_ref, sq_ref):
    """Accumulate per-channel sum / sumsq across M tiles (reduction grid axis)."""
    @pl.when(pl.program_id(0) == 0)
    def _():
        sum_ref[...] = jnp.zeros_like(sum_ref)
        sq_ref[...] = jnp.zeros_like(sq_ref)
    x = x_ref[...]
    sum_ref[...] += jnp.sum(x, axis=1, keepdims=True)
    sq_ref[...] += jnp.sum(x * x, axis=1, keepdims=True)


def _bn_norm_kernel(x_ref, sum_ref, sq_ref, g_ref, b_ref, o_ref, *, count, eps):
    mean = sum_ref[...] * (1.0 / count)
    var = sq_ref[...] * (1.0 / count) - mean * mean       # biased var (PyTorch training)
    scale = g_ref[...] * jax.lax.rsqrt(var + eps)
    o_ref[...] = (x_ref[...] - mean) * scale + b_ref[...]


def batch_norm_cm(x_cm, gamma, beta, eps=1e-5):
    """Training-mode BatchNorm2d on a channel-major (C, M=N*H*W) view. Two tiled passes."""
    C, M = x_cm.shape
    tm = _pick_tile(M, (2048, 1024, 512, 256, 128))
    grid = (M // tm,)

    sums, sqs = pl.pallas_call(
        _bn_stats_kernel,
        out_shape=(jax.ShapeDtypeStruct((C, 1), jnp.float32),
                   jax.ShapeDtypeStruct((C, 1), jnp.float32)),
        grid=grid,
        in_specs=[pl.BlockSpec((C, tm), lambda i: (0, i))],
        out_specs=(pl.BlockSpec((C, 1), lambda i: (0, 0)),
                   pl.BlockSpec((C, 1), lambda i: (0, 0))),
        compiler_params=pltpu.CompilerParams(
            dimension_semantics=("arbitrary",),
            vmem_limit_bytes=_VMEM_LIMIT),
    )(x_cm)

    kernel = functools.partial(_bn_norm_kernel, count=float(M), eps=eps)
    return pl.pallas_call(
        kernel,
        out_shape=jax.ShapeDtypeStruct((C, M), jnp.float32),
        grid=grid,
        in_specs=[pl.BlockSpec((C, tm), lambda i: (0, i)),
                  pl.BlockSpec((C, 1), lambda i: (0, 0)),
                  pl.BlockSpec((C, 1), lambda i: (0, 0)),
                  pl.BlockSpec((C, 1), lambda i: (0, 0)),
                  pl.BlockSpec((C, 1), lambda i: (0, 0))],
        out_specs=pl.BlockSpec((C, tm), lambda i: (0, i)),
        compiler_params=pltpu.CompilerParams(
            dimension_semantics=("parallel",),
            vmem_limit_bytes=_VMEM_LIMIT),
    )(x_cm, sums, sqs,
      gamma.reshape(C, 1).astype(jnp.float32),
      beta.reshape(C, 1).astype(jnp.float32))


def _bn_cnhw(h, gamma, beta):
    C, N, H, W = h.shape
    return batch_norm_cm(h.reshape(C, N * H * W), gamma, beta).reshape(C, N, H, W)


# -------------------------------- conv glue ---------------------------------- #

def _extract_patches(xp, k, s, oh, ow):
    """xp: (C, N, Hp, Wp) -> patches (C*k*k, N*oh*ow) via static strided slices (no gather)."""
    C, N = xp.shape[0], xp.shape[1]
    taps = []
    for kh in range(k):
        for kw in range(k):
            taps.append(jax.lax.slice(
                xp,
                (0, 0, kh, kw),
                (C, N, kh + s * (oh - 1) + 1, kw + s * (ow - 1) + 1),
                (1, 1, s, s)))                                  # (C, N, oh, ow)
    p = jnp.stack(taps, axis=1)                                  # (C, k*k, N, oh, ow)
    return p.reshape(C * k * k, N * oh * ow)


def conv2d_down(x_c, w, bias=None, post_act="none"):
    """nn.Conv2d(Cin, Cout, 4, stride=2, padding=1).  x_c: (Cin,N,H,W) -> (Cout,N,H/2,W/2)."""
    Cin, N, H, W = x_c.shape
    Cout = w.shape[0]
    OH, OW = H // 2, W // 2
    xp = jnp.pad(x_c, ((0, 0), (0, 0), (1, 1), (1, 1)))
    patches = _extract_patches(xp, 4, 2, OH, OW)                 # (Cin*16, N*OH*OW)
    out = _gemm(w.reshape(Cout, Cin * 16), patches, bias, post_act)
    return out.reshape(Cout, N, OH, OW)


def conv_transpose_up(x_c, w_t, bias=None, post_act="none"):
    """nn.ConvTranspose2d(Cin, Cout, 4, stride=2, padding=1), decomposed into 4 exact
    output-phase sub-convolutions (stride-1, 2x2 taps) -> no structural-zero MACs.
    x_c: (Cin, N, H, W), w_t: (Cin, Cout, 4, 4) -> (Cout, N, 2H, 2W)."""
    Cin, N, H, W = x_c.shape
    Cout = w_t.shape[1]
    phase_outs = []
    for po in (0, 1):
        for qo in (0, 1):
            # tap r=0/1 uses W[kh=3,1] (even output rows) or W[kh=2,0] (odd output rows)
            rsl = slice(3, None, -2) if po == 0 else slice(2, None, -2)
            csl = slice(3, None, -2) if qo == 0 else slice(2, None, -2)
            w_sub = w_t[:, :, rsl, csl]                          # (Cin, Cout, 2, 2)
            wmat = jnp.transpose(w_sub, (1, 0, 2, 3)).reshape(Cout, Cin * 4)
            pad_r = (1, 0) if po == 0 else (0, 1)
            pad_c = (1, 0) if qo == 0 else (0, 1)
            xp = jnp.pad(x_c, ((0, 0), (0, 0), pad_r, pad_c))    # (Cin, N, H+1, W+1)
            patches = _extract_patches(xp, 2, 1, H, W)           # (Cin*4, N*H*W)
            out = _gemm(wmat, patches, bias, post_act)           # (Cout, N*H*W)
            phase_outs.append(out.reshape(Cout, N, H, W))
    ph = jnp.stack(phase_outs, axis=0).reshape(2, 2, Cout, N, H, W)
    # y[c, n, 2h'+po, 2w'+qo] = ph[po, qo, c, n, h', w']
    return jnp.transpose(ph, (2, 3, 4, 0, 5, 1)).reshape(Cout, N, 2 * H, 2 * W)


def _leaky_relu(x):
    return jnp.where(x >= 0, x, 0.2 * x)


# -------------------------------- UnetBlock ---------------------------------- #

class UnetBlockPallas:
    """Mirror of the PyTorch UnetBlock with norm_layer = nn.BatchNorm2d (=> use_bias=False
    on the norm'd convs).  Activations flow channel-major (C, N, H, W) internally."""

    def __init__(self, key, in_channel=None, out_channel=1, hidden_channel=1,
                 pre_module=None, inner=False, outer=False, use_dropout=False):
        self.outer, self.inner, self.pre_module = outer, inner, pre_module
        if in_channel is None:
            in_channel = out_channel
        k1, k2, k3 = jax.random.split(key, 3)
        s = 0.1
        # downconv: Conv2d(in, hidden, 4, 2, 1, bias=False)
        self.w_down = s * jax.random.normal(k1, (hidden_channel, in_channel, 4, 4), jnp.float32)
        if outer:
            # ConvTranspose2d(hidden*2, out, 4, 2, 1)  (bias=True by default)
            self.w_up = s * jax.random.normal(k2, (hidden_channel * 2, out_channel, 4, 4), jnp.float32)
            self.b_up = s * jax.random.normal(k3, (out_channel,), jnp.float32)
        elif inner:
            # ConvTranspose2d(hidden, out, 4, 2, 1, bias=False)
            self.w_up = s * jax.random.normal(k2, (hidden_channel, out_channel, 4, 4), jnp.float32)
            self.b_up = None
            self.bn_gamma = jnp.ones((out_channel,), jnp.float32)
            self.bn_beta = jnp.zeros((out_channel,), jnp.float32)
        else:
            # ConvTranspose2d(hidden*2, out, 4, 2, 1, bias=False)
            self.w_up = s * jax.random.normal(k2, (hidden_channel * 2, out_channel, 4, 4), jnp.float32)
            self.b_up = None
            self.down_bn_gamma = jnp.ones((hidden_channel,), jnp.float32)
            self.down_bn_beta = jnp.zeros((hidden_channel,), jnp.float32)
            self.bn_gamma = jnp.ones((out_channel,), jnp.float32)
            self.bn_beta = jnp.zeros((out_channel,), jnp.float32)
        # TODO(synk): nn.Dropout(0.5) (stochastic training-mode mask) is not modeled.
        self.use_dropout = use_dropout

    def __call__(self, x_c):   # x_c: (C, N, H, W)
        if self.outer:
            # model = [downconv, pre_module, ReLU, upconv, Tanh]
            h = conv2d_down(x_c, self.w_down)
            h = self.pre_module(h)
            h = jnp.maximum(h, 0.0)                                   # uprelu, un-expanded
            return conv_transpose_up(h, self.w_up, self.b_up, post_act="tanh")
        elif self.inner:
            # model = [LeakyReLU, downconv, ReLU, upconv, BN];  return cat([x, model(x)])
            h = conv2d_down(_leaky_relu(x_c), self.w_down)
            h = jnp.maximum(h, 0.0)
            h = conv_transpose_up(h, self.w_up)
            h = _bn_cnhw(h, self.bn_gamma, self.bn_beta)
            return jnp.concatenate([x_c, h], axis=0)
        else:
            # model = [LeakyReLU, downconv, BN, pre_module, ReLU, upconv, BN]
            h = conv2d_down(_leaky_relu(x_c), self.w_down)
            h = _bn_cnhw(h, self.down_bn_gamma, self.down_bn_beta)
            h = self.pre_module(h)
            h = jnp.maximum(h, 0.0)
            h = conv_transpose_up(h, self.w_up)
            h = _bn_cnhw(h, self.bn_gamma, self.bn_beta)
            return jnp.concatenate([x_c, h], axis=0)


def unet_forward(outer_block, x_nchw):
    """Public NCHW interface: single transpose in (NCHW -> CNHW) and out."""
    y_c = outer_block(jnp.transpose(x_nchw, (1, 0, 2, 3)))
    return jnp.transpose(y_c, (1, 0, 2, 3))


# ---------------------------------- main -------------------------------------- #

if __name__ == "__main__":
    key = jax.random.PRNGKey(0)
    k_x, k_inner, k_outer = jax.random.split(key, 3)

    # Two-level U-Net: innermost block wrapped by the outermost block.
    inner_blk = UnetBlockPallas(k_inner, in_channel=None, out_channel=8,
                                hidden_channel=16, inner=True)
    outer_blk = UnetBlockPallas(k_outer, in_channel=3, out_channel=3,
                                hidden_channel=8, pre_module=inner_blk, outer=True)

    x = jax.random.normal(k_x, (2, 3, 16, 16), jnp.float32)       # NCHW

    fwd = jax.jit(lambda xx: unet_forward(outer_blk, xx))
    y = jax.block_until_ready(fwd(x))

    assert y.shape == (2, 3, 16, 16), y.shape
    assert bool(jnp.all(jnp.isfinite(y)))
    assert bool(jnp.all(jnp.abs(y) <= 1.0 + 1e-6))                # Tanh output range
    print("KERNEL_OK")
</pallas_src>

<mosaic_0001>
module attributes {stable_mosaic.version = 11 : i64} {
  func.func @_gemm_kernel(%arg0: i32, %arg1: i32, %arg2: memref<8x48xbf16, #tpu.memory_space<vmem>>, %arg3: memref<48x128xbf16, #tpu.memory_space<vmem>>, %arg4: memref<8x128xf32, #tpu.memory_space<vmem>>, %arg5: memref<8x128xf32, #tpu.memory_space<vmem>>) attributes {dimension_semantics = [#tpu.dimension_semantics<parallel>, #tpu.dimension_semantics<arbitrary>], iteration_bounds = array<i64: 1, 1>, scalar_prefetch = 0 : i64, scratch_operands = 1 : i64, tpu.core_type = #tpu.core_type<tc>, window_params = [{transform_indices = @transform_0, window_bounds = array<i64: 8, 48>}, {transform_indices = @transform_1, window_bounds = array<i64: 48, 128>}, {transform_indices = @transform_2, window_bounds = array<i64: 8, 128>}]} {
    %c0_i32 = arith.constant 0 : i32
    %0 = arith.cmpi eq, %arg1, %c0_i32 : i32
    %1 = arith.extui %0 : i1 to i32
    %c0_i32_0 = arith.constant 0 : i32
    %2 = arith.cmpi ne, %1, %c0_i32_0 : i32
    scf.if %2 {
      %cst_10 = arith.constant 0.000000e+00 : f32
      %12 = vector.broadcast %cst_10 : f32 to vector<8x128xf32>
      %c0_11 = arith.constant 0 : index
      %c0_12 = arith.constant 0 : index
      %13 = vector.load %arg5[%c0_11, %c0_12] : memref<8x128xf32, #tpu.memory_space<vmem>>, vector<8x128xf32>
      tpu.vector_store %arg5[%c0_11, %c0_12], %12 {strides = array<i32>} : memref<8x128xf32, #tpu.memory_space<vmem>>, vector<8x128xf32>,
    } else {
    }
    %c0 = arith.constant 0 : index
    %c0_1 = arith.constant 0 : index
    %3 = vector.load %arg5[%c0, %c0_1] : memref<8x128xf32, #tpu.memory_space<vmem>>, vector<8x128xf32>
    %c0_2 = arith.constant 0 : index
    %c0_3 = arith.constant 0 : index
    %4 = vector.load %arg2[%c0_2, %c0_3] : memref<8x48xbf16, #tpu.memory_space<vmem>>, vector<8x48xbf16>
    %c0_4 = arith.constant 0 : index
    %c0_5 = arith.constant 0 : index
    %5 = vector.load %arg3[%c0_4, %c0_5] : memref<48x128xbf16, #tpu.memory_space<vmem>>, vector<48x128xbf16>
    %cst = arith.constant dense<0.000000e+00> : vector<8x128xf32>
    %6 = tpu.matmul %4, %5, %cst {dimension_numbers = #tpu.dot_dimension_numbers<[1], [0], [0], [1], [0, 0, 1, 1], [], []>} : vector<8x48xbf16>, vector<48x128xbf16>, vector<8x128xf32> -> vector<8x128xf32>
    %7 = arith.addf %3, %6 : vector<8x128xf32>
    %c0_6 = arith.constant 0 : index
    %c0_7 = arith.constant 0 : index
    %8 = vector.load %arg5[%c0_6, %c0_7] : memref<8x128xf32, #tpu.memory_space<vmem>>, vector<8x128xf32>
    tpu.vector_store %arg5[%c0_6, %c0_7], %7 {strides = array<i32>} : memref<8x128xf32, #tpu.memory_space<vmem>>, vector<8x128xf32>,
    %c0_i32_8 = arith.constant 0 : i32
    %9 = arith.cmpi eq, %arg1, %c0_i32_8 : i32
    %10 = arith.extui %9 : i1 to i32
    %c0_i32_9 = arith.constant 0 : i32
    %11 = arith.cmpi ne, %10, %c0_i32_9 : i32
    scf.if %11 {
      %c0_10 = arith.constant 0 : index
      %c0_11 = arith.constant 0 : index
      %12 = vector.load %arg5[%c0_10, %c0_11] : memref<8x128xf32, #tpu.memory_space<vmem>>, vector<8x128xf32>
      %c0_12 = arith.constant 0 : index
      %c0_13 = arith.constant 0 : index
      %13 = vector.load %arg4[%c0_12, %c0_13] : memref<8x128xf32, #tpu.memory_space<vmem>>, vector<8x128xf32>
      tpu.vector_store %arg4[%c0_12, %c0_13], %12 {strides = array<i32>} : memref<8x128xf32, #tpu.memory_space<vmem>>, vector<8x128xf32>,
    } else {
    }
    return
  }
  func.func @transform_0(%arg0: i32, %arg1: i32) -> (i32, i32) {
    %c0_i32 = arith.constant 0 : i32
    %c0_i32_0 = arith.constant 0 : i32
    return %c0_i32, %arg1 : i32, i32
  }
  func.func @transform_1(%arg0: i32, %arg1: i32) -> (i32, i32) {
    %c0_i32 = arith.constant 0 : i32
    return %arg1, %arg0 : i32, i32
  }
  func.func @transform_2(%arg0: i32, %arg1: i32) -> (i32, i32) {
    %c0_i32 = arith.constant 0 : i32
    %c0_i32_0 = arith.constant 0 : i32
    return %c0_i32, %arg0 : i32, i32
  }
}

module attributes {stable_mosaic.version = 11 : i64} {
  func.func @_gemm_kernel(%arg0: i32, %arg1: i32, %arg2: memref<16x128xbf16, #tpu.memory_space<vmem>>, %arg3: memref<128x32xbf16, #tpu.memory_space<vmem>>, %arg4: memref<16x32xf32, #tpu.memory_space<vmem>>, %arg5: memref<16x32xf32, #tpu.memory_space<vmem>>) attributes {dimension_semantics = [#tpu.dimension_semantics<parallel>, #tpu.dimension_semantics<arbitrary>], iteration_bounds = array<i64: 1, 1>, scalar_prefetch = 0 : i64, scratch_operands = 1 : i64, tpu.core_type = #tpu.core_type<tc>, window_params = [{transform_indices = @transform_0, window_bounds = array<i64: 16, 128>}, {transform_indices = @transform_1, window_bounds = array<i64: 128, 32>}, {transform_indices = @transform_2, window_bounds = array<i64: 16, 32>}]} {
    %c0_i32 = arith.constant 0 : i32
    %0 = arith.cmpi eq, %arg1, %c0_i32 : i32
    %1 = arith.extui %0 : i1 to i32
    %c0_i32_0 = arith.constant 0 : i32
    %2 = arith.cmpi ne, %1, %c0_i32_0 : i32
    scf.if %2 {
      %cst_10 = arith.constant 0.000000e+00 : f32
      %12 = vector.broadcast %cst_10 : f32 to vector<16x32xf32>
      %c0_11 = arith.constant 0 : index
      %c0_12 = arith.constant 0 : index
      %13 = vector.load %arg5[%c0_11, %c0_12] : memref<16x32xf32, #tpu.memory_space<vmem>>, vector<16x32xf32>
      tpu.vector_store %arg5[%c0_11, %c0_12], %12 {strides = array<i32>} : memref<16x32xf32, #tpu.memory_space<vmem>>, vector<16x32xf32>,
    } else {
    }
    %c0 = arith.constant 0 : index
    %c0_1 = arith.constant 0 : index
    %3 = vector.load %arg5[%c0, %c0_1] : memref<16x32xf32, #tpu.memory_space<vmem>>, vector<16x32xf32>
    %c0_2 = arith.constant 0 : index
    %c0_3 = arith.constant 0 : index
    %4 = vector.load %arg2[%c0_2, %c0_3] : memref<16x128xbf16, #tpu.memory_space<vmem>>, vector<16x128xbf16>
    %c0_4 = arith.constant 0 : index
    %c0_5 = arith.constant 0 : index
    %5 = vector.load %arg3[%c0_4, %c0_5] : memref<128x32xbf16, #tpu.memory_space<vmem>>, vector<128x32xbf16>
    %cst = arith.constant dense<0.000000e+00> : vector<16x32xf32>
    %6 = tpu.matmul %4, %5, %cst {dimension_numbers = #tpu.dot_dimension_numbers<[1], [0], [0], [1], [0, 0, 1, 1], [], []>} : vector<16x128xbf16>, vector<128x32xbf16>, vector<16x32xf32> -> vector<16x32xf32>
    %7 = arith.addf %3, %6 : vector<16x32xf32>
    %c0_6 = arith.constant 0 : index
    %c0_7 = arith.constant 0 : index
    %8 = vector.load %arg5[%c0_6, %c0_7] : memref<16x32xf32, #tpu.memory_space<vmem>>, vector<16x32xf32>
    tpu.vector_store %arg5[%c0_6, %c0_7], %7 {strides = array<i32>} : memref<16x32xf32, #tpu.memory_space<vmem>>, vector<16x32xf32>,
    %c0_i32_8 = arith.constant 0 : i32
    %9 = arith.cmpi eq, %arg1, %c0_i32_8 : i32
    %10 = arith.extui %9 : i1 to i32
    %c0_i32_9 = arith.constant 0 : i32
    %11 = arith.cmpi ne, %10, %c0_i32_9 : i32
    scf.if %11 {
      %c0_10 = arith.constant 0 : index
      %c0_11 = arith.constant 0 : index
      %12 = vector.load %arg5[%c0_10, %c0_11] : memref<16x32xf32, #tpu.memory_space<vmem>>, vector<16x32xf32>
      %c0_12 = arith.constant 0 : index
      %c0_13 = arith.constant 0 : index
      %13 = vector.load %arg4[%c0_12, %c0_13] : memref<16x32xf32, #tpu.memory_space<vmem>>, vector<16x32xf32>
      tpu.vector_store %arg4[%c0_12, %c0_13], %12 {strides = array<i32>} : memref<16x32xf32, #tpu.memory_space<vmem>>, vector<16x32xf32>,
    } else {
    }
    return
  }
  func.func @transform_0(%arg0: i32, %arg1: i32) -> (i32, i32) {
    %c0_i32 = arith.constant 0 : i32
    %c0_i32_0 = arith.constant 0 : i32
    return %c0_i32, %arg1 : i32, i32
  }
  func.func @transform_1(%arg0: i32, %arg1: i32) -> (i32, i32) {
    %c0_i32 = arith.constant 0 : i32
    return %arg1, %arg0 : i32, i32
  }
  func.func @transform_2(%arg0: i32, %arg1: i32) -> (i32, i32) {
    %c0_i32 = arith.constant 0 : i32
    %c0_i32_0 = arith.constant 0 : i32
    return %c0_i32, %arg0 : i32, i32
  }
}

module attributes {stable_mosaic.version = 11 : i64} {
  func.func @_gemm_kernel(%arg0: i32, %arg1: i32, %arg2: memref<8x64xbf16, #tpu.memory_space<vmem>>, %arg3: memref<64x32xbf16, #tpu.memory_space<vmem>>, %arg4: memref<8x32xf32, #tpu.memory_space<vmem>>, %arg5: memref<8x32xf32, #tpu.memory_space<vmem>>) attributes {dimension_semantics = [#tpu.dimension_semantics<parallel>, #tpu.dimension_semantics<arbitrary>], iteration_bounds = array<i64: 1, 1>, scalar_prefetch = 0 : i64, scratch_operands = 1 : i64, tpu.core_type = #tpu.core_type<tc>, window_params = [{transform_indices = @transform_0, window_bounds = array<i64: 8, 64>}, {transform_indices = @transform_1, window_bounds = array<i64: 64, 32>}, {transform_indices = @transform_2, window_bounds = array<i64: 8, 32>}]} {
    %c0_i32 = arith.constant 0 : i32
    %0 = arith.cmpi eq, %arg1, %c0_i32 : i32
    %1 = arith.extui %0 : i1 to i32
    %c0_i32_0 = arith.constant 0 : i32
    %2 = arith.cmpi ne, %1, %c0_i32_0 : i32
    scf.if %2 {
      %cst_10 = arith.constant 0.000000e+00 : f32
      %12 = vector.broadcast %cst_10 : f32 to vector<8x32xf32>
      %c0_11 = arith.constant 0 : index
      %c0_12 = arith.constant 0 : index
      %13 = vector.load %arg5[%c0_11, %c0_12] : memref<8x32xf32, #tpu.memory_space<vmem>>, vector<8x32xf32>
      tpu.vector_store %arg5[%c0_11, %c0_12], %12 {strides = array<i32>} : memref<8x32xf32, #tpu.memory_space<vmem>>, vector<8x32xf32>,
    } else {
    }
    %c0 = arith.constant 0 : index
    %c0_1 = arith.constant 0 : index
    %3 = vector.load %arg5[%c0, %c0_1] : memref<8x32xf32, #tpu.memory_space<vmem>>, vector<8x32xf32>
    %c0_2 = arith.constant 0 : index
    %c0_3 = arith.constant 0 : index
    %4 = vector.load %arg2[%c0_2, %c0_3] : memref<8x64xbf16, #tpu.memory_space<vmem>>, vector<8x64xbf16>
    %c0_4 = arith.constant 0 : index
    %c0_5 = arith.constant 0 : index
    %5 = vector.load %arg3[%c0_4, %c0_5] : memref<64x32xbf16, #tpu.memory_space<vmem>>, vector<64x32xbf16>
    %cst = arith.constant dense<0.000000e+00> : vector<8x32xf32>
    %6 = tpu.matmul %4, %5, %cst {dimension_numbers = #tpu.dot_dimension_numbers<[1], [0], [0], [1], [0, 0, 1, 1], [], []>} : vector<8x64xbf16>, vector<64x32xbf16>, vector<8x32xf32> -> vector<8x32xf32>
    %7 = arith.addf %3, %6 : vector<8x32xf32>
    %c0_6 = arith.constant 0 : index
    %c0_7 = arith.constant 0 : index
    %8 = vector.load %arg5[%c0_6, %c0_7] : memref<8x32xf32, #tpu.memory_space<vmem>>, vector<8x32xf32>
    tpu.vector_store %arg5[%c0_6, %c0_7], %7 {strides = array<i32>} : memref<8x32xf32, #tpu.memory_space<vmem>>, vector<8x32xf32>,
    %c0_i32_8 = arith.constant 0 : i32
    %9 = arith.cmpi eq, %arg1, %c0_i32_8 : i32
    %10 = arith.extui %9 : i1 to i32
    %c0_i32_9 = arith.constant 0 : i32
    %11 = arith.cmpi ne, %10, %c0_i32_9 : i32
    scf.if %11 {
      %c0_10 = arith.constant 0 : index
      %c0_11 = arith.constant 0 : index
      %12 = vector.load %arg5[%c0_10, %c0_11] : memref<8x32xf32, #tpu.memory_space<vmem>>, vector<8x32xf32>
      %c0_12 = arith.constant 0 : index
      %c0_13 = arith.constant 0 : index
      %13 = vector.load %arg4[%c0_12, %c0_13] : memref<8x32xf32, #tpu.memory_space<vmem>>, vector<8x32xf32>
      tpu.vector_store %arg4[%c0_12, %c0_13], %12 {strides = array<i32>} : memref<8x32xf32, #tpu.memory_space<vmem>>, vector<8x32xf32>,
    } else {
    }
    return
  }
  func.func @transform_0(%arg0: i32, %arg1: i32) -> (i32, i32) {
    %c0_i32 = arith.constant 0 : i32
    %c0_i32_0 = arith.constant 0 : i32
    return %c0_i32, %arg1 : i32, i32
  }
  func.func @transform_1(%arg0: i32, %arg1: i32) -> (i32, i32) {
    %c0_i32 = arith.constant 0 : i32
    return %arg1, %arg0 : i32, i32
  }
  func.func @transform_2(%arg0: i32, %arg1: i32) -> (i32, i32) {
    %c0_i32 = arith.constant 0 : i32
    %c0_i32_0 = arith.constant 0 : i32
    return %c0_i32, %arg0 : i32, i32
  }
}

module attributes {stable_mosaic.version = 11 : i64} {
  func.func @_bn_stats_kernel(%arg0: i32, %arg1: memref<8x128xf32, #tpu.memory_space<vmem>>, %arg2: memref<8x1xf32, #tpu.memory_space<vmem>>, %arg3: memref<8x1xf32, #tpu.memory_space<vmem>>) attributes {dimension_semantics = [#tpu.dimension_semantics<arbitrary>], iteration_bounds = array<i64: 1>, scalar_prefetch = 0 : i64, scratch_operands = 0 : i64, tpu.core_type = #tpu.core_type<tc>, window_params = [{transform_indices = @transform_0, window_bounds = array<i64: 8, 128>}, {pipeline_mode = #tpu.pipeline_mode<synchronous>, transform_indices = @transform_1, window_bounds = array<i64: 8, 1>}, {pipeline_mode = #tpu.pipeline_mode<synchronous>, transform_indices = @transform_2, window_bounds = array<i64: 8, 1>}]} {
    %c0_i32 = arith.constant 0 : i32
    %0 = arith.cmpi eq, %arg0, %c0_i32 : i32
    %1 = arith.extui %0 : i1 to i32
    %c0_i32_0 = arith.constant 0 : i32
    %2 = arith.cmpi ne, %1, %c0_i32_0 : i32
    scf.if %2 {
      %cst_11 = arith.constant 0.000000e+00 : f32
      %15 = vector.broadcast %cst_11 : f32 to vector<8x1xf32>
      %c0_12 = arith.constant 0 : index
      %c0_13 = arith.constant 0 : index
      %16 = vector.load %arg2[%c0_12, %c0_13] : memref<8x1xf32, #tpu.memory_space<vmem>>, vector<8x1xf32>
      tpu.vector_store %arg2[%c0_12, %c0_13], %15 {strides = array<i32>} : memref<8x1xf32, #tpu.memory_space<vmem>>, vector<8x1xf32>,
      %cst_14 = arith.constant 0.000000e+00 : f32
      %17 = vector.broadcast %cst_14 : f32 to vector<8x1xf32>
      %c0_15 = arith.constant 0 : index
      %c0_16 = arith.constant 0 : index
      %18 = vector.load %arg3[%c0_15, %c0_16] : memref<8x1xf32, #tpu.memory_space<vmem>>, vector<8x1xf32>
      tpu.vector_store %arg3[%c0_15, %c0_16], %17 {strides = array<i32>} : memref<8x1xf32, #tpu.memory_space<vmem>>, vector<8x1xf32>,
    } else {
    }
    %c0 = arith.constant 0 : index
    %c0_1 = arith.constant 0 : index
    %3 = vector.load %arg1[%c0, %c0_1] : memref<8x128xf32, #tpu.memory_space<vmem>>, vector<8x128xf32>
    %c0_2 = arith.constant 0 : index
    %c0_3 = arith.constant 0 : index
    %4 = vector.load %arg2[%c0_2, %c0_3] : memref<8x1xf32, #tpu.memory_space<vmem>>, vector<8x1xf32>
    %cst = arith.constant dense<0.000000e+00> : vector<8xf32>
    %5 = vector.multi_reduction <add>, %3, %cst [1] : vector<8x128xf32> to vector<8xf32>
    %6 = vector.shape_cast %5 : vector<8xf32> to vector<8x1xf32>
    %7 = arith.addf %4, %6 : vector<8x1xf32>
    %c0_4 = arith.constant 0 : index
    %c0_5 = arith.constant 0 : index
    %8 = vector.load %arg2[%c0_4, %c0_5] : memref<8x1xf32, #tpu.memory_space<vmem>>, vector<8x1xf32>
    tpu.vector_store %arg2[%c0_4, %c0_5], %7 {strides = array<i32>} : memref<8x1xf32, #tpu.memory_space<vmem>>, vector<8x1xf32>,
    %c0_6 = arith.constant 0 : index
    %c0_7 = arith.constant 0 : index
    %9 = vector.load %arg3[%c0_6, %c0_7] : memref<8x1xf32, #tpu.memory_space<vmem>>, vector<8x1xf32>
    %10 = arith.mulf %3, %3 : vector<8x128xf32>
    %cst_8 = arith.constant dense<0.000000e+00> : vector<8xf32>
    %11 = vector.multi_reduction <add>, %10, %cst_8 [1] : vector<8x128xf32> to vector<8xf32>
    %12 = vector.shape_cast %11 : vector<8xf32> to vector<8x1xf32>
    %13 = arith.addf %9, %12 : vector<8x1xf32>
    %c0_9 = arith.constant 0 : index
    %c0_10 = arith.constant 0 : index
    %14 = vector.load %arg3[%c0_9, %c0_10] : memref<8x1xf32, #tpu.memory_space<vmem>>, vector<8x1xf32>
    tpu.vector_store %arg3[%c0_9, %c0_10], %13 {strides = array<i32>} : memref<8x1xf32, #tpu.memory_space<vmem>>, vector<8x1xf32>,
    return
  }
  func.func @transform_0(%arg0: i32) -> (i32, i32) {
    %c0_i32 = arith.constant 0 : i32
    %c0_i32_0 = arith.constant 0 : i32
    return %c0_i32, %arg0 : i32, i32
  }
  func.func @transform_1(%arg0: i32) -> (i32, i32) {
    %c0_i32 = arith.constant 0 : i32
    %c0_i32_0 = arith.constant 0 : i32
    %c0_i32_1 = arith.constant 0 : i32
    return %c0_i32, %c0_i32_0 : i32, i32
  }
  func.func @transform_2(%arg0: i32) -> (i32, i32) {
    %c0_i32 = arith.constant 0 : i32
    %c0_i32_0 = arith.constant 0 : i32
    %c0_i32_1 = arith.constant 0 : i32
    return %c0_i32, %c0_i32_0 : i32, i32
  }
}

module attributes {stable_mosaic.version = 11 : i64} {
  func.func @_bn_norm_kernel(%arg0: i32, %arg1: memref<8x128xf32, #tpu.memory_space<vmem>>, %arg2: memref<8x1xf32, #tpu.memory_space<vmem>>, %arg3: memref<8x1xf32, #tpu.memory_space<vmem>>, %arg4: memref<8x1xf32, #tpu.memory_space<vmem>>, %arg5: memref<8x1xf32, #tpu.memory_space<vmem>>, %arg6: memref<8x128xf32, #tpu.memory_space<vmem>>) attributes {dimension_semantics = [#tpu.dimension_semantics<parallel>], iteration_bounds = array<i64: 1>, scalar_prefetch = 0 : i64, scratch_operands = 0 : i64, tpu.core_type = #tpu.core_type<tc>, window_params = [{transform_indices = @transform_0, window_bounds = array<i64: 8, 128>}, {pipeline_mode = #tpu.pipeline_mode<synchronous>, transform_indices = @transform_1, window_bounds = array<i64: 8, 1>}, {pipeline_mode = #tpu.pipeline_mode<synchronous>, transform_indices = @transform_2, window_bounds = array<i64: 8, 1>}, {pipeline_mode = #tpu.pipeline_mode<synchronous>, transform_indices = @transform_3, window_bounds = array<i64: 8, 1>}, {pipeline_mode = #tpu.pipeline_mode<synchronous>, transform_indices = @transform_4, window_bounds = array<i64: 8, 1>}, {transform_indices = @transform_5, window_bounds = array<i64: 8, 128>}]} {
    %c0 = arith.constant 0 : index
    %c0_0 = arith.constant 0 : index
    %0 = vector.load %arg2[%c0, %c0_0] : memref<8x1xf32, #tpu.memory_space<vmem>>, vector<8x1xf32>
    %cst = arith.constant 7.812500e-03 : f32
    %1 = vector.broadcast %cst : f32 to vector<8x1xf32>
    %2 = arith.mulf %0, %1 : vector<8x1xf32>
    %c0_1 = arith.constant 0 : index
    %c0_2 = arith.constant 0 : index
    %3 = vector.load %arg3[%c0_1, %c0_2] : memref<8x1xf32, #tpu.memory_space<vmem>>, vector<8x1xf32>
    %cst_3 = arith.constant 7.812500e-03 : f32
    %4 = vector.broadcast %cst_3 : f32 to vector<8x1xf32>
    %5 = arith.mulf %3, %4 : vector<8x1xf32>
    %6 = arith.mulf %2, %2 : vector<8x1xf32>
    %7 = arith.subf %5, %6 : vector<8x1xf32>
    %c0_4 = arith.constant 0 : index
    %c0_5 = arith.constant 0 : index
    %8 = vector.load %arg4[%c0_4, %c0_5] : memref<8x1xf32, #tpu.memory_space<vmem>>, vector<8x1xf32>
    %cst_6 = arith.constant 9.99999974E-6 : f32
    %9 = vector.broadcast %cst_6 : f32 to vector<8x1xf32>
    %10 = arith.addf %7, %9 : vector<8x1xf32>
    %11 = math.rsqrt %10 : vector<8x1xf32>
    %12 = arith.mulf %8, %11 : vector<8x1xf32>
    %c0_7 = arith.constant 0 : index
    %c0_8 = arith.constant 0 : index
    %13 = vector.load %arg1[%c0_7, %c0_8] : memref<8x128xf32, #tpu.memory_space<vmem>>, vector<8x128xf32>
    %14 = vector.broadcast %2 : vector<8x1xf32> to vector<8x128xf32>
    %15 = arith.subf %13, %14 : vector<8x128xf32>
    %16 = vector.broadcast %12 : vector<8x1xf32> to vector<8x128xf32>
    %17 = arith.mulf %15, %16 : vector<8x128xf32>
    %c0_9 = arith.constant 0 : index
    %c0_10 = arith.constant 0 : index
    %18 = vector.load %arg5[%c0_9, %c0_10] : memref<8x1xf32, #tpu.memory_space<vmem>>, vector<8x1xf32>
    %19 = vector.broadcast %18 : vector<8x1xf32> to vector<8x128xf32>
    %20 = arith.addf %17, %19 : vector<8x128xf32>
    %c0_11 = arith.constant 0 : index
    %c0_12 = arith.constant 0 : index
    %21 = vector.load %arg6[%c0_11, %c0_12] : memref<8x128xf32, #tpu.memory_space<vmem>>, vector<8x128xf32>
    tpu.vector_store %arg6[%c0_11, %c0_12], %20 {strides = array<i32>} : memref<8x128xf32, #tpu.memory_space<vmem>>, vector<8x128xf32>,
    return
  }
  func.func @transform_0(%arg0: i32) -> (i32, i32) {
    %c0_i32 = arith.constant 0 : i32
    %c0_i32_0 = arith.constant 0 : i32
    return %c0_i32, %arg0 : i32, i32
  }
  func.func @transform_1(%arg0: i32) -> (i32, i32) {
    %c0_i32 = arith.constant 0 : i32
    %c0_i32_0 = arith.constant 0 : i32
    %c0_i32_1 = arith.constant 0 : i32
    return %c0_i32, %c0_i32_0 : i32, i32
  }
  func.func @transform_2(%arg0: i32) -> (i32, i32) {
    %c0_i32 = arith.constant 0 : i32
    %c0_i32_0 = arith.constant 0 : i32
    %c0_i32_1 = arith.constant 0 : i32
    return %c0_i32, %c0_i32_0 : i32, i32
  }
  func.func @transform_3(%arg0: i32) -> (i32, i32) {
    %c0_i32 = arith.constant 0 : i32
    %c0_i32_0 = arith.constant 0 : i32
    %c0_i32_1 = arith.constant 0 : i32
    return %c0_i32, %c0_i32_0 : i32, i32
  }
  func.func @transform_4(%arg0: i32) -> (i32, i32) {
    %c0_i32 = arith.constant 0 : i32
    %c0_i32_0 = arith.constant 0 : i32
    %c0_i32_1 = arith.constant 0 : i32
    return %c0_i32, %c0_i32_0 : i32, i32
  }
  func.func @transform_5(%arg0: i32) -> (i32, i32) {
    %c0_i32 = arith.constant 0 : i32
    %c0_i32_0 = arith.constant 0 : i32
    return %c0_i32, %arg0 : i32, i32
  }
}

module attributes {stable_mosaic.version = 11 : i64} {
  func.func @_gemm_kernel(%arg0: i32, %arg1: i32, %arg2: memref<3x64xbf16, #tpu.memory_space<vmem>>, %arg3: memref<64x128xbf16, #tpu.memory_space<vmem>>, %arg4: memref<3x1xf32, #tpu.memory_space<vmem>>, %arg5: memref<3x128xf32, #tpu.memory_space<vmem>>, %arg6: memref<3x128xf32, #tpu.memory_space<vmem>>) attributes {dimension_semantics = [#tpu.dimension_semantics<parallel>, #tpu.dimension_semantics<arbitrary>], iteration_bounds = array<i64: 1, 1>, scalar_prefetch = 0 : i64, scratch_operands = 1 : i64, tpu.core_type = #tpu.core_type<tc>, window_params = [{transform_indices = @transform_0, window_bounds = array<i64: 3, 64>}, {transform_indices = @transform_1, window_bounds = array<i64: 64, 128>}, {pipeline_mode = #tpu.pipeline_mode<synchronous>, transform_indices = @transform_2, window_bounds = array<i64: 3, 1>}, {transform_indices = @transform_3, window_bounds = array<i64: 3, 128>}]} {
    %c0_i32 = arith.constant 0 : i32
    %0 = arith.cmpi eq, %arg1, %c0_i32 : i32
    %1 = arith.extui %0 : i1 to i32
    %c0_i32_0 = arith.constant 0 : i32
    %2 = arith.cmpi ne, %1, %c0_i32_0 : i32
    scf.if %2 {
      %cst_10 = arith.constant 0.000000e+00 : f32
      %12 = vector.broadcast %cst_10 : f32 to vector<3x128xf32>
      %c0_11 = arith.constant 0 : index
      %c0_12 = arith.constant 0 : index
      %13 = vector.load %arg6[%c0_11, %c0_12] : memref<3x128xf32, #tpu.memory_space<vmem>>, vector<3x128xf32>
      tpu.vector_store %arg6[%c0_11, %c0_12], %12 {strides = array<i32>} : memref<3x128xf32, #tpu.memory_space<vmem>>, vector<3x128xf32>,
    } else {
    }
    %c0 = arith.constant 0 : index
    %c0_1 = arith.constant 0 : index
    %3 = vector.load %arg6[%c0, %c0_1] : memref<3x128xf32, #tpu.memory_space<vmem>>, vector<3x128xf32>
    %c0_2 = arith.constant 0 : index
    %c0_3 = arith.constant 0 : index
    %4 = vector.load %arg2[%c0_2, %c0_3] : memref<3x64xbf16, #tpu.memory_space<vmem>>, vector<3x64xbf16>
    %c0_4 = arith.constant 0 : index
    %c0_5 = arith.constant 0 : index
    %5 = vector.load %arg3[%c0_4, %c0_5] : memref<64x128xbf16, #tpu.memory_space<vmem>>, vector<64x128xbf16>
    %cst = arith.constant dense<0.000000e+00> : vector<3x128xf32>
    %6 = tpu.matmul %4, %5, %cst {dimension_numbers = #tpu.dot_dimension_numbers<[1], [0], [0], [1], [0, 0, 1, 1], [], []>} : vector<3x64xbf16>, vector<64x128xbf16>, vector<3x128xf32> -> vector<3x128xf32>
    %7 = arith.addf %3, %6 : vector<3x128xf32>
    %c0_6 = arith.constant 0 : index
    %c0_7 = arith.constant 0 : index
    %8 = vector.load %arg6[%c0_6, %c0_7] : memref<3x128xf32, #tpu.memory_space<vmem>>, vector<3x128xf32>
    tpu.vector_store %arg6[%c0_6, %c0_7], %7 {strides = array<i32>} : memref<3x128xf32, #tpu.memory_space<vmem>>, vector<3x128xf32>,
    %c0_i32_8 = arith.constant 0 : i32
    %9 = arith.cmpi eq, %arg1, %c0_i32_8 : i32
    %10 = arith.extui %9 : i1 to i32
    %c0_i32_9 = arith.constant 0 : i32
    %11 = arith.cmpi ne, %10, %c0_i32_9 : i32
    scf.if %11 {
      %c0_10 = arith.constant 0 : index
      %c0_11 = arith.constant 0 : index
      %12 = vector.load %arg6[%c0_10, %c0_11] : memref<3x128xf32, #tpu.memory_space<vmem>>, vector<3x128xf32>
      %c0_12 = arith.constant 0 : index
      %c0_13 = arith.constant 0 : index
      %13 = vector.load %arg4[%c0_12, %c0_13] : memref<3x1xf32, #tpu.memory_space<vmem>>, vector<3x1xf32>
      %14 = vector.broadcast %13 : vector<3x1xf32> to vector<3x128xf32>
      %15 = arith.addf %12, %14 : vector<3x128xf32>
      %16 = math.tanh %15 : vector<3x128xf32>
      %c0_14 = arith.constant 0 : index
      %c0_15 = arith.constant 0 : index
      %17 = vector.load %arg5[%c0_14, %c0_15] : memref<3x128xf32, #tpu.memory_space<vmem>>, vector<3x128xf32>
      tpu.vector_store %arg5[%c0_14, %c0_15], %16 {strides = array<i32>} : memref<3x128xf32, #tpu.memory_space<vmem>>, vector<3x128xf32>,
    } else {
    }
    return
  }
  func.func @transform_0(%arg0: i32, %arg1: i32) -> (i32, i32) {
    %c0_i32 = arith.constant 0 : i32
    %c0_i32_0 = arith.constant 0 : i32
    return %c0_i32, %arg1 : i32, i32
  }
  func.func @transform_1(%arg0: i32, %arg1: i32) -> (i32, i32) {
    %c0_i32 = arith.constant 0 : i32
    return %arg1, %arg0 : i32, i32
  }
  func.func @transform_2(%arg0: i32, %arg1: i32) -> (i32, i32) {
    %c0_i32 = arith.constant 0 : i32
    %c0_i32_0 = arith.constant 0 : i32
    %c0_i32_1 = arith.constant 0 : i32
    return %c0_i32, %c0_i32_0 : i32, i32
  }
  func.func @transform_3(%arg0: i32, %arg1: i32) -> (i32, i32) {
    %c0_i32 = arith.constant 0 : i32
    %c0_i32_0 = arith.constant 0 : i32
    return %c0_i32, %arg0 : i32, i32
  }
}

</mosaic_0001>

<llo_original>
// kernel: _lambda_.12
$region0: #{_lambda_.12}
  #allocation0 [shape = 'u32[]', space=smem, size = 0x4, offset = 0x4, fixed_abs, tag = 'smem constant byte address 0x4 - core index']
  #allocation1 [shape = 'u32[144,128]{1,0:T(1,128)}', space=vmem, size = 0x12000, scoped, tag = 'internal scratch']
  #allocation2 [shape = 'f32[8,128]{1,0:T(8,128)}', space=vmem, size = 0x1000, scoped, tag = 'scratch operand']
  %s0 = inlined_call_operand.vmem [shape: bf16[8,48], index: 0, kind: input, shape index: {}]
  %s1 = inlined_call_operand.vmem [shape: bf16[48,128], index: 1, kind: input, shape index: {}]
  %s2 = inlined_call_operand.vmem [shape: f32[8,128], index: 2, kind: output, shape index: {}]
  %s3 = sld [smem:[#allocation0]]
  $region26: #{_lambda_.12} parent=0
    _
  %s5 = ssub.s32 1, %s3
  %s6 = scalar_select 0, %s5, %s3
  // Predicated region
  $region2: #{_lambda_.12} parent=0 // pred_check
    _
  $region3: #{_lambda_.12} parent=0 // pred_check_branch
    %8 = sbr.rel (0) target = $region5
  $region4: #{_lambda_.12} parent=0 // pred_region
    _
  $region5: #{_lambda_.12} parent=0 // pred_fallthru
    _
  // Predicated region
  $region6: #{_lambda_.12} parent=0 // pred_check
    _
  $region7: #{_lambda_.12} parent=0 // pred_check_branch
    %10 = sbr.rel (0) target = $region9
  $region8: #{_lambda_.12} parent=0 // pred_region
    _
  $region9: #{_lambda_.12} parent=0 // pred_fallthru
    _
  %p12 = scmp.eq.s32.totalorder 0, 0
  // Predicated region
  $region10: #{_lambda_.12} parent=0 // pred_check
    %p13 = pneg %p12
  $region11: #{_lambda_.12} parent=0 // pred_check_branch
    %15 = sbr.rel (%p13) target = $region13
  $region12: #{_lambda_.12} parent=0 // pred_region
    %16 = vst [vmem:[#allocation2] sm:$0xff] 0.0
  $region13: #{_lambda_.12} parent=0 // pred_fallthru
    _
  %v17 = vld [vmem:[#allocation2] sm:$0xff]
  %v18 = vld [vmem:[%s0] sm:$0xf]
  %v19 = vld [vmem:[%s1] sm:$0xf]
  %v20 = vld [vmem:[%s1 + $0x4] sm:$0xf]
  %v21 = vld [vmem:[%s1 + $0x8] sm:$0xf]
  %v22 = vld [vmem:[%s1 + $0xc] sm:$0xf]
  %v23 = vld [vmem:[%s1 + $0x10] sm:$0xf]
  %v24 = vld [vmem:[%s1 + $0x14] sm:$0xf]
  %v31 = vunpack.c.l.b16 %v19
  %v32 = vunpack.c.l.b16 %v20
  %v33 = vunpack.c.l.b16 %v21
  %v34 = vunpack.c.l.b16 %v22
  %v35 = vunpack.c.l.b16 %v23
  %v36 = vunpack.c.l.b16 %v24
  %v37 = vpack.c.b16 %v32, %v31
  %v38 = vpack.c.b16 %v34, %v33
  %v39 = vpack.c.b16 %v36, %v35
  %vm43 = vcmask 392192
  %v45 = vsel %vm43, %v18, 0
  %47 = vmatprep.subr.bf16.mxu0 0
  %48 = vmatpush1.bf16.msra.mxu0 %v37
  %49 = vmatprep.subr.bf16.mxu0 0
  %50 = vmatpush1.bf16.msra.mxu0 %v38
  %51 = vmatprep.subr.bf16.mxu0 0
  %52 = vmatpush1.bf16.msra.mxu0 %v39
  %53 = vmatprep.subr.bf16.mxu0 0
  %54 = vmatpush1.bf16.msra.mxu0 0
  %55 = vmatprep.subr.bf16.mxu0 0
  %56 = vmatpush1.bf16.msra.mxu0 0
  %57 = vmatprep.subr.bf16.mxu0 0
  %58 = vmatpush1.bf16.msra.mxu0 0
  %59 = vmatprep.subr.bf16.mxu0 0
  %60 = vmatpush1.bf16.msra.mxu0 0
  %61 = vmatprep.subr.bf16.mxu0 0
  %62 = vmatpush1.bf16.msra.mxu0 0
  %63 = vmatprep.subr.bf16.mxu0 0
  %64 = vmatpush1.bf16.msra.mxu0 0
  %65 = vmatprep.subr.bf16.mxu0 0
  %66 = vmatpush1.bf16.msra.mxu0 0
  %67 = vmatprep.subr.bf16.mxu0 0
  %68 = vmatpush1.bf16.msra.mxu0 0
  %69 = vmatprep.subr.bf16.mxu0 0
  %70 = vmatpush1.bf16.msra.mxu0 0
  %71 = vmatprep.subr.bf16.mxu0 0
  %72 = vmatpush1.bf16.msra.mxu0 0
  %73 = vmatprep.subr.bf16.mxu0 0
  %74 = vmatpush1.bf16.msra.mxu0 0
  %75 = vmatprep.subr.bf16.mxu0 0
  %76 = vmatpush1.bf16.msra.mxu0 0
  %77 = vmatprep.subr.bf16.mxu0 0
  %78 = vmatpush1.bf16.msra.mxu0 0
  %79 = vmatprep.mubr.bf16.mxu0 0
  %80 = vmatmul.mubr.bf16.gmra.mrb[0].mxu0 %v45
  %v81 = vpop.f32.mrb[0].mxu0
  %v82 = vadd.f32 0.0, %v81
  %v83 = vpop.f32.mrb[0].mxu0
  %v84 = vpop.f32.mrb[0].mxu0
  %v85 = vpop.f32.mrb[0].mxu0
  %86 = vdwg.mxu0
  %v87 = vadd.f32 %v17, %v82
  %88 = vst [vmem:[#allocation2] sm:$0xff] %v87
  // Predicated region
  $region14: #{_lambda_.12} parent=0 // pred_check
    %p89 = pneg %p12
  $region15: #{_lambda_.12} parent=0 // pred_check_branch
    %91 = sbr.rel (%p89) target = $region17
  $region16: #{_lambda_.12} parent=0 // pred_region
    %v92 = vld [vmem:[#allocation2] sm:$0xff]
    %93 = vst [vmem:[%s2] sm:$0xff] %v92
  $region17: #{_lambda_.12} parent=0 // pred_fallthru
    _
  // Predicated region
  $region18: #{_lambda_.12} parent=0 // pred_check
    _
  $region19: #{_lambda_.12} parent=0 // pred_check_branch
    %95 = sbr.rel (0) target = $region21
  $region20: #{_lambda_.12} parent=0 // pred_region
    _
  $region21: #{_lambda_.12} parent=0 // pred_fallthru
    _
  // Predicated region
  $region22: #{_lambda_.12} parent=0 // pred_check
    _
  $region23: #{_lambda_.12} parent=0 // pred_check_branch
    %97 = sbr.rel (0) target = $region25
  $region24: #{_lambda_.12} parent=0 // pred_region
    _
  $region25: #{_lambda_.12} parent=0 // pred_fallthru
    _

// kernel: _lambda_.13
$region0: #{_lambda_.13}
  #allocation0 [shape = 'u32[]', space=smem, size = 0x4, offset = 0x4, fixed_abs, tag = 'smem constant byte address 0x4 - core index']
  #allocation1 [shape = 'u32[144,128]{1,0:T(1,128)}', space=vmem, size = 0x12000, scoped, tag = 'internal scratch']
  #allocation2 [shape = 'f32[16,32]{1,0:T(8,128)}', space=vmem, size = 0x2000, scoped, tag = 'scratch operand']
  %s0 = inlined_call_operand.vmem [shape: bf16[16,128], index: 0, kind: input, shape index: {}]
  %s1 = inlined_call_operand.vmem [shape: bf16[128,32], index: 1, kind: input, shape index: {}]
  %s2 = inlined_call_operand.vmem [shape: f32[16,32], index: 2, kind: output, shape index: {}]
  %s3 = sld [smem:[#allocation0]]
  $region26: #{_lambda_.13} parent=0
    _
  %s5 = ssub.s32 1, %s3
  %s6 = scalar_select 0, %s5, %s3
  // Predicated region
  $region2: #{_lambda_.13} parent=0 // pred_check
    _
  $region3: #{_lambda_.13} parent=0 // pred_check_branch
    %8 = sbr.rel (0) target = $region5
  $region4: #{_lambda_.13} parent=0 // pred_region
    _
  $region5: #{_lambda_.13} parent=0 // pred_fallthru
    _
  // Predicated region
  $region6: #{_lambda_.13} parent=0 // pred_check
    _
  $region7: #{_lambda_.13} parent=0 // pred_check_branch
    %10 = sbr.rel (0) target = $region9
  $region8: #{_lambda_.13} parent=0 // pred_region
    _
  $region9: #{_lambda_.13} parent=0 // pred_fallthru
    _
  %p12 = scmp.eq.s32.totalorder 0, 0
  // Predicated region
  $region10: #{_lambda_.13} parent=0 // pred_check
    %p13 = pneg %p12
  $region11: #{_lambda_.13} parent=0 // pred_check_branch
    %15 = sbr.rel (%p13) target = $region13
  $region12: #{_lambda_.13} parent=0 // pred_region
    %vm16 = vcmask 261120
    %17 = vst.msk [vmem:[#allocation2] sm:$0xff] %vm16, 0.0
    %18 = vst.msk [vmem:[#allocation2 + $0x8] sm:$0xff] %vm16, 0.0
  $region13: #{_lambda_.13} parent=0 // pred_fallthru
    _
  %v19 = vld [vmem:[#allocation2] sm:$0xff]
  %v20 = vld [vmem:[#allocation2 + $0x8] sm:$0xff]
  %v21 = vld [vmem:[%s0] sm:$0xf]
  %v22 = vld [vmem:[%s0 + $0x4] sm:$0xf]
  %v23 = vld [vmem:[%s1] sm:$0xf]
  %v24 = vld [vmem:[%s1 + $0x4] sm:$0xf]
  %v25 = vld [vmem:[%s1 + $0x8] sm:$0xf]
  %v26 = vld [vmem:[%s1 + $0xc] sm:$0xf]
  %v27 = vld [vmem:[%s1 + $0x10] sm:$0xf]
  %v28 = vld [vmem:[%s1 + $0x14] sm:$0xf]
  %v29 = vld [vmem:[%s1 + $0x18] sm:$0xf]
  %v30 = vld [vmem:[%s1 + $0x1c] sm:$0xf]
  %v31 = vld [vmem:[%s1 + $0x20] sm:$0xf]
  %v32 = vld [vmem:[%s1 + $0x24] sm:$0xf]
  %v33 = vld [vmem:[%s1 + $0x28] sm:$0xf]
  %v34 = vld [vmem:[%s1 + $0x2c] sm:$0xf]
  %v35 = vld [vmem:[%s1 + $0x30] sm:$0xf]
  %v36 = vld [vmem:[%s1 + $0x34] sm:$0xf]
  %v37 = vld [vmem:[%s1 + $0x38] sm:$0xf]
  %v38 = vld [vmem:[%s1 + $0x3c] sm:$0xf]
  %v41 = vunpack.c.l.b16 %v21
  %v42 = vunpack.c.l.b16 %v22
  %v43 = vpack.c.b16 %v42, %v41
  %v61 = vunpack.c.l.b16 %v23
  %v62 = vunpack.c.l.b16 %v24
  %v63 = vunpack.c.l.b16 %v25
  %v64 = vunpack.c.l.b16 %v26
  %v65 = vunpack.c.l.b16 %v27
  %v66 = vunpack.c.l.b16 %v28
  %v67 = vunpack.c.l.b16 %v29
  %v68 = vunpack.c.l.b16 %v30
  %v69 = vunpack.c.l.b16 %v31
  %v70 = vunpack.c.l.b16 %v32
  %v71 = vunpack.c.l.b16 %v33
  %v72 = vunpack.c.l.b16 %v34
  %v73 = vunpack.c.l.b16 %v35
  %v74 = vunpack.c.l.b16 %v36
  %v75 = vunpack.c.l.b16 %v37
  %v76 = vunpack.c.l.b16 %v38
  %v77 = vpack.c.b16 %v62, %v61
  %v78 = vpack.c.b16 %v64, %v63
  %v79 = vpack.c.b16 %v66, %v65
  %v80 = vpack.c.b16 %v68, %v67
  %v81 = vpack.c.b16 %v70, %v69
  %v82 = vpack.c.b16 %v72, %v71
  %v83 = vpack.c.b16 %v74, %v73
  %v84 = vpack.c.b16 %v76, %v75
  %93 = vmatprep.subr.bf16.mxu0 0
  %94 = vmatpush1.bf16.msra.mxu0 %v77
  %95 = vmatprep.subr.bf16.mxu0 0
  %96 = vmatpush1.bf16.msra.mxu0 %v78
  %97 = vmatprep.subr.bf16.mxu0 0
  %98 = vmatpush1.bf16.msra.mxu0 %v79
  %99 = vmatprep.subr.bf16.mxu0 0
  %100 = vmatpush1.bf16.msra.mxu0 %v80
  %101 = vmatprep.subr.bf16.mxu0 0
  %102 = vmatpush1.bf16.msra.mxu0 %v81
  %103 = vmatprep.subr.bf16.mxu0 0
  %104 = vmatpush1.bf16.msra.mxu0 %v82
  %105 = vmatprep.subr.bf16.mxu0 0
  %106 = vmatpush1.bf16.msra.mxu0 %v83
  %107 = vmatprep.subr.bf16.mxu0 0
  %108 = vmatpush1.bf16.msra.mxu0 %v84
  %109 = vmatprep.subr.bf16.mxu0 0
  %110 = vmatpush1.bf16.msra.mxu0 0
  %111 = vmatprep.subr.bf16.mxu0 0
  %112 = vmatpush1.bf16.msra.mxu0 0
  %113 = vmatprep.subr.bf16.mxu0 0
  %114 = vmatpush1.bf16.msra.mxu0 0
  %115 = vmatprep.subr.bf16.mxu0 0
  %116 = vmatpush1.bf16.msra.mxu0 0
  %117 = vmatprep.subr.bf16.mxu0 0
  %118 = vmatpush1.bf16.msra.mxu0 0
  %119 = vmatprep.subr.bf16.mxu0 0
  %120 = vmatpush1.bf16.msra.mxu0 0
  %121 = vmatprep.subr.bf16.mxu0 0
  %122 = vmatpush1.bf16.msra.mxu0 0
  %123 = vmatprep.subr.bf16.mxu0 0
  %124 = vmatpush1.bf16.msra.mxu0 0
  %125 = vmatprep.mubr.bf16.mxu0 0
  %126 = vmatmul.mubr.bf16.gmra.mrb[0].mxu0 %v43
  %v127 = vpop.f32.mrb[0].mxu0
  %v128 = vadd.f32 0.0, %v127
  %v129 = vpop.f32.mrb[0].mxu0
  %v130 = vpop.f32.mrb[0].mxu0
  %v131 = vadd.f32 0.0, %v130
  %v132 = vpop.f32.mrb[0].mxu0
  %133 = vdwg.mxu0
  %v134 = vadd.f32 %v19, %v128
  %v135 = vadd.f32 %v20, %v131
  %vm136 = vcmask 261120
  %137 = vst.msk [vmem:[#allocation2] sm:$0xff] %vm136, %v134
  %138 = vst.msk [vmem:[#allocation2 + $0x8] sm:$0xff] %vm136, %v135
  // Predicated region
  $region14: #{_lambda_.13} parent=0 // pred_check
    %p139 = pneg %p12
  $region15: #{_lambda_.13} parent=0 // pred_check_branch
    %141 = sbr.rel (%p139) target = $region17
  $region16: #{_lambda_.13} parent=0 // pred_region
    %v142 = vld [vmem:[#allocation2] sm:$0xff]
    %v143 = vld [vmem:[#allocation2 + $0x8] sm:$0xff]
    %144 = vst.msk [vmem:[%s2] sm:$0xff] %vm136, %v142
    %145 = vst.msk [vmem:[%s2 + $0x8] sm:$0xff] %vm136, %v143
  $region17: #{_lambda_.13} parent=0 // pred_fallthru
    _
  // Predicated region
  $region18: #{_lambda_.13} parent=0 // pred_check
    _
  $region19: #{_lambda_.13} parent=0 // pred_check_branch
    %147 = sbr.rel (0) target = $region21
  $region20: #{_lambda_.13} parent=0 // pred_region
    _
  $region21: #{_lambda_.13} parent=0 // pred_fallthru
    _
  // Predicated region
  $region22: #{_lambda_.13} parent=0 // pred_check
    _
  $region23: #{_lambda_.13} parent=0 // pred_check_branch
    %149 = sbr.rel (0) target = $region25
  $region24: #{_lambda_.13} parent=0 // pred_region
    _
  $region25: #{_lambda_.13} parent=0 // pred_fallthru
    _

// kernel: _lambda_.14
$region0: #{_lambda_.14}
  #allocation0 [shape = 'u32[]', space=smem, size = 0x4, offset = 0x4, fixed_abs, tag = 'smem constant byte address 0x4 - core index']
  #allocation1 [shape = 'u32[144,128]{1,0:T(1,128)}', space=vmem, size = 0x12000, scoped, tag = 'internal scratch']
  #allocation2 [shape = 'f32[8,32]{1,0:T(8,128)}', space=vmem, size = 0x1000, scoped, tag = 'scratch operand']
  %s0 = inlined_call_operand.vmem [shape: bf16[8,64], index: 0, kind: input, shape index: {}]
  %s1 = inlined_call_operand.vmem [shape: bf16[64,32], index: 1, kind: input, shape index: {}]
  %s2 = inlined_call_operand.vmem [shape: f32[8,32], index: 2, kind: output, shape index: {}]
  %s3 = sld [smem:[#allocation0]]
  $region26: #{_lambda_.14} parent=0
    _
  %s5 = ssub.s32 1, %s3
  %s6 = scalar_select 0, %s5, %s3
  // Predicated region
  $region2: #{_lambda_.14} parent=0 // pred_check
    _
  $region3: #{_lambda_.14} parent=0 // pred_check_branch
    %8 = sbr.rel (0) target = $region5
  $region4: #{_lambda_.14} parent=0 // pred_region
    _
  $region5: #{_lambda_.14} parent=0 // pred_fallthru
    _
  // Predicated region
  $region6: #{_lambda_.14} parent=0 // pred_check
    _
  $region7: #{_lambda_.14} parent=0 // pred_check_branch
    %10 = sbr.rel (0) target = $region9
  $region8: #{_lambda_.14} parent=0 // pred_region
    _
  $region9: #{_lambda_.14} parent=0 // pred_fallthru
    _
  %p12 = scmp.eq.s32.totalorder 0, 0
  // Predicated region
  $region10: #{_lambda_.14} parent=0 // pred_check
    %p13 = pneg %p12
  $region11: #{_lambda_.14} parent=0 // pred_check_branch
    %15 = sbr.rel (%p13) target = $region13
  $region12: #{_lambda_.14} parent=0 // pred_region
    %vm16 = vcmask 261120
    %17 = vst.msk [vmem:[#allocation2] sm:$0xff] %vm16, 0.0
  $region13: #{_lambda_.14} parent=0 // pred_fallthru
    _
  %v18 = vld [vmem:[#allocation2] sm:$0xff]
  %v19 = vld [vmem:[%s0] sm:$0xf]
  %v20 = vld [vmem:[%s1] sm:$0xf]
  %v21 = vld [vmem:[%s1 + $0x4] sm:$0xf]
  %v22 = vld [vmem:[%s1 + $0x8] sm:$0xf]
  %v23 = vld [vmem:[%s1 + $0xc] sm:$0xf]
  %v24 = vld [vmem:[%s1 + $0x10] sm:$0xf]
  %v25 = vld [vmem:[%s1 + $0x14] sm:$0xf]
  %v26 = vld [vmem:[%s1 + $0x18] sm:$0xf]
  %v27 = vld [vmem:[%s1 + $0x1c] sm:$0xf]
  %v36 = vunpack.c.l.b16 %v20
  %v37 = vunpack.c.l.b16 %v21
  %v38 = vunpack.c.l.b16 %v22
  %v39 = vunpack.c.l.b16 %v23
  %v40 = vunpack.c.l.b16 %v24
  %v41 = vunpack.c.l.b16 %v25
  %v42 = vunpack.c.l.b16 %v26
  %v43 = vunpack.c.l.b16 %v27
  %v44 = vpack.c.b16 %v37, %v36
  %v45 = vpack.c.b16 %v39, %v38
  %v46 = vpack.c.b16 %v41, %v40
  %v47 = vpack.c.b16 %v43, %v42
  %vm52 = vcmask 523264
  %v54 = vsel %vm52, %v19, 0
  %56 = vmatprep.subr.bf16.mxu0 0
  %57 = vmatpush1.bf16.msra.mxu0 %v44
  %58 = vmatprep.subr.bf16.mxu0 0
  %59 = vmatpush1.bf16.msra.mxu0 %v45
  %60 = vmatprep.subr.bf16.mxu0 0
  %61 = vmatpush1.bf16.msra.mxu0 %v46
  %62 = vmatprep.subr.bf16.mxu0 0
  %63 = vmatpush1.bf16.msra.mxu0 %v47
  %64 = vmatprep.subr.bf16.mxu0 0
  %65 = vmatpush1.bf16.msra.mxu0 0
  %66 = vmatprep.subr.bf16.mxu0 0
  %67 = vmatpush1.bf16.msra.mxu0 0
  %68 = vmatprep.subr.bf16.mxu0 0
  %69 = vmatpush1.bf16.msra.mxu0 0
  %70 = vmatprep.subr.bf16.mxu0 0
  %71 = vmatpush1.bf16.msra.mxu0 0
  %72 = vmatprep.subr.bf16.mxu0 0
  %73 = vmatpush1.bf16.msra.mxu0 0
  %74 = vmatprep.subr.bf16.mxu0 0
  %75 = vmatpush1.bf16.msra.mxu0 0
  %76 = vmatprep.subr.bf16.mxu0 0
  %77 = vmatpush1.bf16.msra.mxu0 0
  %78 = vmatprep.subr.bf16.mxu0 0
  %79 = vmatpush1.bf16.msra.mxu0 0
  %80 = vmatprep.subr.bf16.mxu0 0
  %81 = vmatpush1.bf16.msra.mxu0 0
  %82 = vmatprep.subr.bf16.mxu0 0
  %83 = vmatpush1.bf16.msra.mxu0 0
  %84 = vmatprep.subr.bf16.mxu0 0
  %85 = vmatpush1.bf16.msra.mxu0 0
  %86 = vmatprep.subr.bf16.mxu0 0
  %87 = vmatpush1.bf16.msra.mxu0 0
  %88 = vmatprep.mubr.bf16.mxu0 0
  %89 = vmatmul.mubr.bf16.gmra.mrb[0].mxu0 %v54
  %v90 = vpop.f32.mrb[0].mxu0
  %v91 = vadd.f32 0.0, %v90
  %v92 = vpop.f32.mrb[0].mxu0
  %v93 = vpop.f32.mrb[0].mxu0
  %v94 = vpop.f32.mrb[0].mxu0
  %95 = vdwg.mxu0
  %v96 = vadd.f32 %v18, %v91
  %vm97 = vcmask 261120
  %98 = vst.msk [vmem:[#allocation2] sm:$0xff] %vm97, %v96
  // Predicated region
  $region14: #{_lambda_.14} parent=0 // pred_check
    %p99 = pneg %p12
  $region15: #{_lambda_.14} parent=0 // pred_check_branch
    %101 = sbr.rel (%p99) target = $region17
  $region16: #{_lambda_.14} parent=0 // pred_region
    %v102 = vld [vmem:[#allocation2] sm:$0xff]
    %103 = vst.msk [vmem:[%s2] sm:$0xff] %vm97, %v102
  $region17: #{_lambda_.14} parent=0 // pred_fallthru
    _
  // Predicated region
  $region18: #{_lambda_.14} parent=0 // pred_check
    _
  $region19: #{_lambda_.14} parent=0 // pred_check_branch
    %105 = sbr.rel (0) target = $region21
  $region20: #{_lambda_.14} parent=0 // pred_region
    _
  $region21: #{_lambda_.14} parent=0 // pred_fallthru
    _
  // Predicated region
  $region22: #{_lambda_.14} parent=0 // pred_check
    _
  $region23: #{_lambda_.14} parent=0 // pred_check_branch
    %107 = sbr.rel (0) target = $region25
  $region24: #{_lambda_.14} parent=0 // pred_region
    _
  $region25: #{_lambda_.14} parent=0 // pred_fallthru
    _

// kernel: _lambda_.18
$region0: #{_lambda_.18}
  #allocation0 [shape = 'u32[]', space=smem, size = 0x4, offset = 0x4, fixed_abs, tag = 'smem constant byte address 0x4 - core index']
  #allocation1 [shape = 'u32[144,128]{1,0:T(1,128)}', space=vmem, size = 0x12000, scoped, tag = 'internal scratch']
  %s0 = inlined_call_operand.vmem [shape: f32[8,128], index: 0, kind: input, shape index: {}]
  %s1 = inlined_call_operand.vmem [shape: f32[8,1], index: 1, kind: output, shape index: {0}]
  %s2 = inlined_call_operand.vmem [shape: f32[8,1], index: 2, kind: output, shape index: {1}]
  %3 = xla_tuple %s1, %s2
  %s4 = sld [smem:[#allocation0]]
  $region26: #{_lambda_.18} parent=0
    _
  %s6 = ssub.s32 1, %s4
  %s7 = scalar_select 0, %s6, %s4
  // Predicated region
  $region2: #{_lambda_.18} parent=0 // pred_check
    _
  $region3: #{_lambda_.18} parent=0 // pred_check_branch
    %9 = sbr.rel (0) target = $region5
  $region4: #{_lambda_.18} parent=0 // pred_region
    _
  $region5: #{_lambda_.18} parent=0 // pred_fallthru
    _
  %p10 = scmp.eq.s32.totalorder 0, 0
  // Predicated region
  $region6: #{_lambda_.18} parent=0 // pred_check
    %p11 = pneg %p10
  $region7: #{_lambda_.18} parent=0 // pred_check_branch
    %13 = sbr.rel (%p11) target = $region9
  $region8: #{_lambda_.18} parent=0 // pred_region
    %vm14 = vcmask 7168
    %15 = vst.msk [vmem:[%s1] sm:$0xff] %vm14, 0.0
    %16 = vst.msk [vmem:[%s2] sm:$0xff] %vm14, 0.0
  $region9: #{_lambda_.18} parent=0 // pred_fallthru
    _
  %v17 = vld [vmem:[%s0] sm:$0xff]
  %v18 = vld [vmem:[%s1] sm:$0xff]
  %19 = vadd.xlane.f32.xlu0 %v17
  %v20 = vpop.xlane.xlu0 %19
  %v21 = vadd.f32 %v18, %v20
  %vm22 = vcmask 7168
  %23 = vst.msk [vmem:[%s1] sm:$0xff] %vm22, %v21
  %v24 = vld [vmem:[%s2] sm:$0xff]
  %v25 = vmul.f32 %v17, %v17
  %26 = vadd.xlane.f32.xlu0 %v25
  %v27 = vpop.xlane.xlu0 %26
  %v28 = vadd.f32 %v24, %v27
  %29 = vst.msk [vmem:[%s2] sm:$0xff] %vm22, %v28
  // Predicated region
  $region10: #{_lambda_.18} parent=0 // pred_check
    _
  $region11: #{_lambda_.18} parent=0 // pred_check_branch
    %31 = sbr.rel (0) target = $region13
  $region12: #{_lambda_.18} parent=0 // pred_region
    _
  $region13: #{_lambda_.18} parent=0 // pred_fallthru
    _
  // Predicated region
  $region14: #{_lambda_.18} parent=0 // pred_check
    _
  $region15: #{_lambda_.18} parent=0 // pred_check_branch
    %33 = sbr.rel (0) target = $region17
  $region16: #{_lambda_.18} parent=0 // pred_region
    _
  $region17: #{_lambda_.18} parent=0 // pred_fallthru
    _
  // Predicated region
  $region18: #{_lambda_.18} parent=0 // pred_check
    _
  $region19: #{_lambda_.18} parent=0 // pred_check_branch
    %35 = sbr.rel (0) target = $region21
  $region20: #{_lambda_.18} parent=0 // pred_region
    _
  $region21: #{_lambda_.18} parent=0 // pred_fallthru
    _
  // Predicated region
  $region22: #{_lambda_.18} parent=0 // pred_check
    _
  $region23: #{_lambda_.18} parent=0 // pred_check_branch
    %37 = sbr.rel (0) target = $region25
  $region24: #{_lambda_.18} parent=0 // pred_region
    _
  $region25: #{_lambda_.18} parent=0 // pred_fallthru
    _

// kernel: _lambda_.19
$region0: #{_lambda_.19}
  #allocation0 [shape = 'u32[]', space=smem, size = 0x4, offset = 0x4, fixed_abs, tag = 'smem constant byte address 0x4 - core index']
  #allocation1 [shape = 'u32[144,128]{1,0:T(1,128)}', space=vmem, size = 0x12000, scoped, tag = 'internal scratch']
  %s0 = inlined_call_operand.vmem [shape: f32[8,128], index: 0, kind: input, shape index: {}]
  %s1 = inlined_call_operand.vmem [shape: f32[8,1], index: 1, kind: input, shape index: {}]
  %s2 = inlined_call_operand.vmem [shape: f32[8,1], index: 2, kind: input, shape index: {}]
  %s3 = inlined_call_operand.vmem [shape: f32[8,1], index: 3, kind: input, shape index: {}]
  %s4 = inlined_call_operand.vmem [shape: f32[8,1], index: 4, kind: input, shape index: {}]
  %s5 = inlined_call_operand.vmem [shape: f32[8,128], index: 5, kind: output, shape index: {}]
  %s6 = sld [smem:[#allocation0]]
  $region30: #{_lambda_.19} parent=0
    _
  %s8 = ssub.s32 1, %s6
  %s9 = scalar_select 0, %s8, %s6
  // Predicated region
  $region2: #{_lambda_.19} parent=0 // pred_check
    _
  $region3: #{_lambda_.19} parent=0 // pred_check_branch
    %11 = sbr.rel (0) target = $region5
  $region4: #{_lambda_.19} parent=0 // pred_region
    _
  $region5: #{_lambda_.19} parent=0 // pred_fallthru
    _
  // Predicated region
  $region6: #{_lambda_.19} parent=0 // pred_check
    _
  $region7: #{_lambda_.19} parent=0 // pred_check_branch
    %13 = sbr.rel (0) target = $region9
  $region8: #{_lambda_.19} parent=0 // pred_region
    _
  $region9: #{_lambda_.19} parent=0 // pred_fallthru
    _
  // Predicated region
  $region10: #{_lambda_.19} parent=0 // pred_check
    _
  $region11: #{_lambda_.19} parent=0 // pred_check_branch
    %15 = sbr.rel (0) target = $region13
  $region12: #{_lambda_.19} parent=0 // pred_region
    _
  $region13: #{_lambda_.19} parent=0 // pred_fallthru
    _
  // Predicated region
  $region14: #{_lambda_.19} parent=0 // pred_check
    _
  $region15: #{_lambda_.19} parent=0 // pred_check_branch
    %17 = sbr.rel (0) target = $region17
  $region16: #{_lambda_.19} parent=0 // pred_region
    _
  $region17: #{_lambda_.19} parent=0 // pred_fallthru
    _
  // Predicated region
  $region18: #{_lambda_.19} parent=0 // pred_check
    _
  $region19: #{_lambda_.19} parent=0 // pred_check_branch
    %19 = sbr.rel (0) target = $region21
  $region20: #{_lambda_.19} parent=0 // pred_region
    _
  $region21: #{_lambda_.19} parent=0 // pred_fallthru
    _
  %v20 = vld [vmem:[%s1] sm:$0xff]
  %v21 = vmul.f32 %v20, 0.0078125
  %v22 = vld [vmem:[%s2] sm:$0xff]
  %v23 = vmul.f32 %v22, 0.0078125
  %v24 = vmul.f32 %v21, %v21
  %v25 = vsub.f32 %v23, %v24
  %v26 = vld [vmem:[%s3] sm:$0xff]
  %v27 = vadd.f32 %v25, 1e-05
  %v28 = vrsqrt.pop %v27
  %v29 = vmul.f32 %v26, %v28
  %v30 = vld [vmem:[%s0] sm:$0xff]
  %32 = vset.pattern.permute.xlu0 0
  %33 = vperm.xlu0 %32, %v21
  %v34 = vpop.permute.xlu0 %33
  %v36 = vsub.f32 %v30, %v34
  %38 = vset.pattern.permute.xlu0 0
  %39 = vperm.xlu0 %38, %v29
  %v40 = vpop.permute.xlu0 %39
  %v42 = vmul.f32 %v36, %v40
  %v43 = vld [vmem:[%s4] sm:$0xff]
  %45 = vset.pattern.permute.xlu0 0
  %46 = vperm.xlu0 %45, %v43
  %v47 = vpop.permute.xlu0 %46
  %v49 = vadd.f32 %v42, %v47
  %50 = vst [vmem:[%s5] sm:$0xff] %v49
  // Predicated region
  $region22: #{_lambda_.19} parent=0 // pred_check
    _
  $region23: #{_lambda_.19} parent=0 // pred_check_branch
    %52 = sbr.rel (0) target = $region25
  $region24: #{_lambda_.19} parent=0 // pred_region
    _
  $region25: #{_lambda_.19} parent=0 // pred_fallthru
    _
  // Predicated region
  $region26: #{_lambda_.19} parent=0 // pred_check
    _
  $region27: #{_lambda_.19} parent=0 // pred_check_branch
    %54 = sbr.rel (0) target = $region29
  $region28: #{_lambda_.19} parent=0 // pred_region
    _
  $region29: #{_lambda_.19} parent=0 // pred_fallthru
    _

// kernel: _lambda_.23
$region0: #{_lambda_.23}
  #allocation0 [shape = 'u32[]', space=smem, size = 0x4, offset = 0x4, fixed_abs, tag = 'smem constant byte address 0x4 - core index']
  #allocation1 [shape = 'u32[144,128]{1,0:T(1,128)}', space=vmem, size = 0x12000, scoped, tag = 'internal scratch']
  #allocation2 [shape = 'f32[3,128]{1,0:T(4,128)}', space=vmem, size = 0x800, scoped, tag = 'scratch operand']
  %s0 = inlined_call_operand.vmem [shape: bf16[3,64], index: 0, kind: input, shape index: {}]
  %s1 = inlined_call_operand.vmem [shape: bf16[64,128], index: 1, kind: input, shape index: {}]
  %s2 = inlined_call_operand.vmem [shape: f32[3,1], index: 2, kind: input, shape index: {}]
  %s3 = inlined_call_operand.vmem [shape: f32[3,128], index: 3, kind: output, shape index: {}]
  %s4 = sld [smem:[#allocation0]]
  $region30: #{_lambda_.23} parent=0
    _
  %s6 = ssub.s32 1, %s4
  %s7 = scalar_select 0, %s6, %s4
  // Predicated region
  $region2: #{_lambda_.23} parent=0 // pred_check
    _
  $region3: #{_lambda_.23} parent=0 // pred_check_branch
    %9 = sbr.rel (0) target = $region5
  $region4: #{_lambda_.23} parent=0 // pred_region
    _
  $region5: #{_lambda_.23} parent=0 // pred_fallthru
    _
  // Predicated region
  $region6: #{_lambda_.23} parent=0 // pred_check
    _
  $region7: #{_lambda_.23} parent=0 // pred_check_branch
    %11 = sbr.rel (0) target = $region9
  $region8: #{_lambda_.23} parent=0 // pred_region
    _
  $region9: #{_lambda_.23} parent=0 // pred_fallthru
    _
  // Predicated region
  $region10: #{_lambda_.23} parent=0 // pred_check
    _
  $region11: #{_lambda_.23} parent=0 // pred_check_branch
    %13 = sbr.rel (0) target = $region13
  $region12: #{_lambda_.23} parent=0 // pred_region
    _
  $region13: #{_lambda_.23} parent=0 // pred_fallthru
    _
  %p15 = scmp.eq.s32.totalorder 0, 0
  // Predicated region
  $region14: #{_lambda_.23} parent=0 // pred_check
    %p16 = pneg %p15
  $region15: #{_lambda_.23} parent=0 // pred_check_branch
    %18 = sbr.rel (%p16) target = $region17
  $region16: #{_lambda_.23} parent=0 // pred_region
    %19 = vst [vmem:[#allocation2] sm:$0x7] 0.0
  $region17: #{_lambda_.23} parent=0 // pred_fallthru
    _
  %v20 = vld [vmem:[#allocation2] sm:$0x7]
  %v21 = vld [vmem:[%s0] sm:$0x3]
  %v22 = vld [vmem:[%s1] sm:$0xf]
  %v23 = vld [vmem:[%s1 + $0x4] sm:$0xf]
  %v24 = vld [vmem:[%s1 + $0x8] sm:$0xf]
  %v25 = vld [vmem:[%s1 + $0xc] sm:$0xf]
  %v26 = vld [vmem:[%s1 + $0x10] sm:$0xf]
  %v27 = vld [vmem:[%s1 + $0x14] sm:$0xf]
  %v28 = vld [vmem:[%s1 + $0x18] sm:$0xf]
  %v29 = vld [vmem:[%s1 + $0x1c] sm:$0xf]
  %v38 = vunpack.c.l.b16 %v22
  %v39 = vunpack.c.l.b16 %v23
  %v40 = vunpack.c.l.b16 %v24
  %v41 = vunpack.c.l.b16 %v25
  %v42 = vunpack.c.l.b16 %v26
  %v43 = vunpack.c.l.b16 %v27
  %v44 = vunpack.c.l.b16 %v28
  %v45 = vunpack.c.l.b16 %v29
  %v46 = vpack.c.b16 %v39, %v38
  %v47 = vpack.c.b16 %v41, %v40
  %v48 = vpack.c.b16 %v43, %v42
  %v49 = vpack.c.b16 %v45, %v44
  %vm54 = vcmask 523264
  %v56 = vsel %vm54, %v21, 0
  %58 = vmatprep.subr.bf16.mxu0 0
  %59 = vmatpush1.bf16.msra.mxu0 %v46
  %60 = vmatprep.subr.bf16.mxu0 0
  %61 = vmatpush1.bf16.msra.mxu0 %v47
  %62 = vmatprep.subr.bf16.mxu0 0
  %63 = vmatpush1.bf16.msra.mxu0 %v48
  %64 = vmatprep.subr.bf16.mxu0 0
  %65 = vmatpush1.bf16.msra.mxu0 %v49
  %66 = vmatprep.subr.bf16.mxu0 0
  %67 = vmatpush1.bf16.msra.mxu0 0
  %68 = vmatprep.subr.bf16.mxu0 0
  %69 = vmatpush1.bf16.msra.mxu0 0
  %70 = vmatprep.subr.bf16.mxu0 0
  %71 = vmatpush1.bf16.msra.mxu0 0
  %72 = vmatprep.subr.bf16.mxu0 0
  %73 = vmatpush1.bf16.msra.mxu0 0
  %74 = vmatprep.subr.bf16.mxu0 0
  %75 = vmatpush1.bf16.msra.mxu0 0
  %76 = vmatprep.subr.bf16.mxu0 0
  %77 = vmatpush1.bf16.msra.mxu0 0
  %78 = vmatprep.subr.bf16.mxu0 0
  %79 = vmatpush1.bf16.msra.mxu0 0
  %80 = vmatprep.subr.bf16.mxu0 0
  %81 = vmatpush1.bf16.msra.mxu0 0
  %82 = vmatprep.subr.bf16.mxu0 0
  %83 = vmatpush1.bf16.msra.mxu0 0
  %84 = vmatprep.subr.bf16.mxu0 0
  %85 = vmatpush1.bf16.msra.mxu0 0
  %86 = vmatprep.subr.bf16.mxu0 0
  %87 = vmatpush1.bf16.msra.mxu0 0
  %88 = vmatprep.subr.bf16.mxu0 0
  %89 = vmatpush1.bf16.msra.mxu0 0
  %90 = vmatprep.mubr.bf16.mxu0 0
  %91 = vmatmul.mubr.bf16.gmra.mrb[0].mxu0 %v56
  %v92 = vpop.f32.mrb[0].mxu0
  %v93 = vadd.f32 0.0, %v92
  %v94 = vpop.f32.mrb[0].mxu0
  %v95 = vpop.f32.mrb[0].mxu0
  %v96 = vpop.f32.mrb[0].mxu0
  %97 = vdwg.mxu0
  %v98 = vadd.f32 %v20, %v93
  %99 = vst [vmem:[#allocation2] sm:$0x7] %v98
  // Predicated region
  $region18: #{_lambda_.23} parent=0 // pred_check
    %p100 = pneg %p15
  $region19: #{_lambda_.23} parent=0 // pred_check_branch
    %102 = sbr.rel (%p100) target = $region21
  $region20: #{_lambda_.23} parent=0 // pred_region
    %v103 = vld [vmem:[#allocation2] sm:$0x7]
    %v104 = vld [vmem:[%s2] sm:$0x7]
    %106 = vset.pattern.permute.xlu0 0
    %107 = vperm.xlu0 %106, %v104
    %v108 = vpop.permute.xlu0 %107
    %v110 = vadd.f32 %v103, %v108
    %v111 = vtanh.pop %v110
    %112 = vst [vmem:[%s3] sm:$0x7] %v111
  $region21: #{_lambda_.23} parent=0 // pred_fallthru
    _
  // Predicated region
  $region22: #{_lambda_.23} parent=0 // pred_check
    _
  $region23: #{_lambda_.23} parent=0 // pred_check_branch
    %114 = sbr.rel (0) target = $region25
  $region24: #{_lambda_.23} parent=0 // pred_region
    _
  $region25: #{_lambda_.23} parent=0 // pred_fallthru
    _
  // Predicated region
  $region26: #{_lambda_.23} parent=0 // pred_check
    _
  $region27: #{_lambda_.23} parent=0 // pred_check_branch
    %116 = sbr.rel (0) target = $region29
  $region28: #{_lambda_.23} parent=0 // pred_region
    _
  $region29: #{_lambda_.23} parent=0 // pred_fallthru
    _

</llo_original>
